<compile_context>
chip_gen: v6e
topology: v6e:2x2x1
jax: 0.10.0
libtpu: 0.0.40
codegen_flags: <defaults>
</compile_context>

<pallas_src>
import jax
import jax.numpy as jnp
from jax.experimental import pallas as pl
from jax.experimental.pallas import tpu as pltpu


EMB = 32            # embedding_size
H1, H2, H3 = 64, 32, 16


def _round_up(x, m):
    return (x + m - 1) // m * m


def ncf_kernel(ue_ref, ie_ref,
               w1u_ref, w1v_ref, b1_ref,
               w2_ref, b2_ref,
               w3_ref, b3_ref,
               wog_ref, wom_ref, bo_ref,
               out_ref):
    # Embedding tiles arrive feature-major: (EMB, BT) in bf16 -> upcast to f32.
    ue = ue_ref[...].astype(jnp.float32)                       # (EMB, BT)
    ie = ie_ref[...].astype(jnp.float32)                       # (EMB, BT)

    # GMF branch: elementwise product (still feature-major).
    gmf = ue * ie                                              # (EMB, BT)

    # MLP branch. torch's cat([ue, ie]) @ W1^T  ==  W1u @ ueT + W1v @ ieT.
    h = (jnp.dot(w1u_ref[...], ue, preferred_element_type=jnp.float32)
         + jnp.dot(w1v_ref[...], ie, preferred_element_type=jnp.float32)
         + b1_ref[...])                                        # (H1, BT)
    h = jnp.maximum(h, 0.0)

    h = jnp.dot(w2_ref[...], h, preferred_element_type=jnp.float32) + b2_ref[...]
    h = jnp.maximum(h, 0.0)                                    # (H2, BT)

    h = jnp.dot(w3_ref[...], h, preferred_element_type=jnp.float32) + b3_ref[...]
    h = jnp.maximum(h, 0.0)                                    # (H3, BT)

    # Output layer. torch's cat([gmf, mlp]) @ Wo^T == Wog @ gmfT + Wom @ mlpT.
    # Result is a lane-dense (1, BT) row -> unmasked vector stores.
    out_ref[...] = (jnp.dot(wog_ref[...], gmf, preferred_element_type=jnp.float32)
                    + jnp.dot(wom_ref[...], h, preferred_element_type=jnp.float32)
                    + bo_ref[...])                             # (1, BT)


def ncf_forward(user_input, item_input, params, *, batch_tile=1024):
    """Full NCF forward: gather in JAX, everything else in one Pallas kernel."""
    B = user_input.shape[0]

    # Lane-aligned batch tile; clamp for small batches, never below 128.
    bt = min(batch_tile, _round_up(B, 128))
    bt = _round_up(bt, 128)
    Bp = _round_up(B, bt)
    grid = Bp // bt

    # Pad indices (index 0 is always valid), gather, then go feature-major.
    up = jnp.pad(user_input, (0, Bp - B))
    ip = jnp.pad(item_input, (0, Bp - B))
    ue_t = params["user_emb"][up].T                            # (EMB, Bp) bf16
    ie_t = params["item_emb"][ip].T                            # (EMB, Bp) bf16

    w1u, w1v, b1 = params["w1u"], params["w1v"], params["b1"]
    w2, b2 = params["w2"], params["b2"]
    w3, b3 = params["w3"], params["b3"]
    wog, wom, bo = params["wog"], params["wom"], params["bo"]

    def full(a):
        return pl.BlockSpec(a.shape, lambda i: (0, 0))

    out_row = pl.pallas_call(
        ncf_kernel,
        out_shape=jax.ShapeDtypeStruct((1, Bp), jnp.float32),
        grid_spec=pltpu.PrefetchScalarGridSpec(
            num_scalar_prefetch=0,
            grid=(grid,),
            in_specs=[
                pl.BlockSpec((EMB, bt), lambda i: (0, i)),     # user emb tile
                pl.BlockSpec((EMB, bt), lambda i: (0, i)),     # item emb tile
                full(w1u), full(w1v), full(b1),
                full(w2), full(b2),
                full(w3), full(b3),
                full(wog), full(wom), full(bo),
            ],
            out_specs=pl.BlockSpec((1, bt), lambda i: (0, i)),
        ),
        compiler_params=pltpu.CompilerParams(
            dimension_semantics=("parallel",)),
    )(ue_t, ie_t, w1u, w1v, b1, w2, b2, w3, b3, wog, wom, bo)

    # (1, Bp) lane-dense row  ->  (B, 1) prediction column.
    return out_row[0, :B][:, None]


def init_params(key, num_users, num_items, emb=EMB):
    """Deterministic synthetic parameters matching the torch module's shapes.

    Linear weights are kept in torch's (out, in) layout (that is exactly what
    the feature-major kernel wants); biases are stored as (out, 1) columns.
    Embedding tables are bf16; everything else f32.
    """
    ks = jax.random.split(key, 8)

    def lin(k, fan_in, fan_out):
        kw, kb = jax.random.split(k)
        lim = 1.0 / (fan_in ** 0.5)
        w = jax.random.uniform(kw, (fan_out, fan_in), jnp.float32, -lim, lim)
        b = jax.random.uniform(kb, (fan_out, 1), jnp.float32, -lim, lim)
        return w, b

    w1, b1 = lin(ks[2], 2 * emb, H1)       # (64, 64), (64, 1)
    w2, b2 = lin(ks[3], H1, H2)            # (32, 64), (32, 1)
    w3, b3 = lin(ks[4], H2, H3)            # (16, 32), (16, 1)
    wo, bo = lin(ks[5], H3 + emb, 1)       # (1, 48),  (1, 1)

    return {
        "user_emb": jax.random.normal(ks[0], (num_users, emb), jnp.float32).astype(jnp.bfloat16),
        "item_emb": jax.random.normal(ks[1], (num_items, emb), jnp.float32).astype(jnp.bfloat16),
        "w1u": w1[:, :emb], "w1v": w1[:, emb:], "b1": b1,
        "w2": w2, "b2": b2,
        "w3": w3, "b3": b3,
        "wog": wo[:, :emb], "wom": wo[:, emb:], "bo": bo,
    }


def ncf_reference(user_input, item_input, params):
    """Pure-JAX reference mirroring the torch forward (f32 math, bf16 tables)."""
    ue = params["user_emb"][user_input].astype(jnp.float32)    # (B, E)
    ie = params["item_emb"][item_input].astype(jnp.float32)    # (B, E)
    w1 = jnp.concatenate([params["w1u"], params["w1v"]], axis=1)
    wo = jnp.concatenate([params["wog"], params["wom"]], axis=1)

    vector = jnp.concatenate([ue, ie], axis=-1)
    gmf = ue * ie
    h = jnp.maximum(vector @ w1.T + params["b1"].T, 0.0)
    h = jnp.maximum(h @ params["w2"].T + params["b2"].T, 0.0)
    h = jnp.maximum(h @ params["w3"].T + params["b3"].T, 0.0)
    x = jnp.concatenate([gmf, h], axis=-1)
    return x @ wo.T + params["bo"].T                            # (B, 1)


if __name__ == "__main__":
    key = jax.random.PRNGKey(0)
    num_users, num_items = 50, 40

    params = init_params(key, num_users, num_items)

    # Small demo batch.
    batch = 16
    ku, ki = jax.random.split(jax.random.fold_in(key, 1))
    user_input = jax.random.randint(ku, (batch,), 0, num_users, dtype=jnp.int32)
    item_input = jax.random.randint(ki, (batch,), 0, num_items, dtype=jnp.int32)

    out = jax.block_until_ready(ncf_forward(user_input, item_input, params))
    ref = ncf_reference(user_input, item_input, params)
    assert out.shape == (batch, 1)
    assert jnp.allclose(out, ref, atol=1e-3, rtol=1e-3), "mismatch vs reference (B=16)"

    # Ragged, multi-tile batch to exercise grid > 1 and tail padding.
    batch2 = 300
    ku2, ki2 = jax.random.split(jax.random.fold_in(key, 2))
    user2 = jax.random.randint(ku2, (batch2,), 0, num_users, dtype=jnp.int32)
    item2 = jax.random.randint(ki2, (batch2,), 0, num_items, dtype=jnp.int32)

    out2 = jax.block_until_ready(ncf_forward(user2, item2, params, batch_tile=128))
    ref2 = ncf_reference(user2, item2, params)
    assert out2.shape == (batch2, 1)
    assert jnp.allclose(out2, ref2, atol=1e-3, rtol=1e-3), "mismatch vs reference (B=300)"

    print("KERNEL_OK")
</pallas_src>

<mosaic_0001>
module attributes {stable_mosaic.version = 11 : i64} {
  func.func @ncf_kernel(%arg0: i32, %arg1: memref<32x128xbf16, #tpu.memory_space<vmem>>, %arg2: memref<32x128xbf16, #tpu.memory_space<vmem>>, %arg3: memref<64x32xf32, #tpu.memory_space<vmem>>, %arg4: memref<64x32xf32, #tpu.memory_space<vmem>>, %arg5: memref<64x1xf32, #tpu.memory_space<vmem>>, %arg6: memref<32x64xf32, #tpu.memory_space<vmem>>, %arg7: memref<32x1xf32, #tpu.memory_space<vmem>>, %arg8: memref<16x32xf32, #tpu.memory_space<vmem>>, %arg9: memref<16x1xf32, #tpu.memory_space<vmem>>, %arg10: memref<1x32xf32, #tpu.memory_space<vmem>>, %arg11: memref<1x16xf32, #tpu.memory_space<vmem>>, %arg12: memref<1x1xf32, #tpu.memory_space<vmem>>, %arg13: memref<1x128xf32, #tpu.memory_space<vmem>>) attributes {dimension_semantics = [#tpu.dimension_semantics<parallel>], iteration_bounds = array<i64: 1>, scalar_prefetch = 0 : i64, scratch_operands = 0 : i64, tpu.core_type = #tpu.core_type<tc>, window_params = [{transform_indices = @transform_0, window_bounds = array<i64: 32, 128>}, {transform_indices = @transform_1, window_bounds = array<i64: 32, 128>}, {pipeline_mode = #tpu.pipeline_mode<synchronous>, transform_indices = @transform_2, window_bounds = array<i64: 64, 32>}, {pipeline_mode = #tpu.pipeline_mode<synchronous>, transform_indices = @transform_3, window_bounds = array<i64: 64, 32>}, {pipeline_mode = #tpu.pipeline_mode<synchronous>, transform_indices = @transform_4, window_bounds = array<i64: 64, 1>}, {pipeline_mode = #tpu.pipeline_mode<synchronous>, transform_indices = @transform_5, window_bounds = array<i64: 32, 64>}, {pipeline_mode = #tpu.pipeline_mode<synchronous>, transform_indices = @transform_6, window_bounds = array<i64: 32, 1>}, {pipeline_mode = #tpu.pipeline_mode<synchronous>, transform_indices = @transform_7, window_bounds = array<i64: 16, 32>}, {pipeline_mode = #tpu.pipeline_mode<synchronous>, transform_indices = @transform_8, window_bounds = array<i64: 16, 1>}, {pipeline_mode = #tpu.pipeline_mode<synchronous>, transform_indices = @transform_9, window_bounds = array<i64: 1, 32>}, {pipeline_mode = #tpu.pipeline_mode<synchronous>, transform_indices = @transform_10, window_bounds = array<i64: 1, 16>}, {pipeline_mode = #tpu.pipeline_mode<synchronous>, transform_indices = @transform_11, window_bounds = array<i64: 1, 1>}, {transform_indices = @transform_12, window_bounds = array<i64: 1, 128>}]} {
    %c0 = arith.constant 0 : index
    %c0_0 = arith.constant 0 : index
    %0 = vector.load %arg1[%c0, %c0_0] : memref<32x128xbf16, #tpu.memory_space<vmem>>, vector<32x128xbf16>
    %1 = arith.extf %0 : vector<32x128xbf16> to vector<32x128xf32>
    %c0_1 = arith.constant 0 : index
    %c0_2 = arith.constant 0 : index
    %2 = vector.load %arg2[%c0_1, %c0_2] : memref<32x128xbf16, #tpu.memory_space<vmem>>, vector<32x128xbf16>
    %3 = arith.extf %2 : vector<32x128xbf16> to vector<32x128xf32>
    %4 = arith.mulf %1, %3 : vector<32x128xf32>
    %c0_3 = arith.constant 0 : index
    %c0_4 = arith.constant 0 : index
    %5 = vector.load %arg3[%c0_3, %c0_4] : memref<64x32xf32, #tpu.memory_space<vmem>>, vector<64x32xf32>
    %cst = arith.constant dense<0.000000e+00> : vector<64x128xf32>
    %6 = tpu.matmul %5, %1, %cst {dimension_numbers = #tpu.dot_dimension_numbers<[1], [0], [0], [1], [0, 0, 1, 1], [], []>} : vector<64x32xf32>, vector<32x128xf32>, vector<64x128xf32> -> vector<64x128xf32>
    %c0_5 = arith.constant 0 : index
    %c0_6 = arith.constant 0 : index
    %7 = vector.load %arg4[%c0_5, %c0_6] : memref<64x32xf32, #tpu.memory_space<vmem>>, vector<64x32xf32>
    %cst_7 = arith.constant dense<0.000000e+00> : vector<64x128xf32>
    %8 = tpu.matmul %7, %3, %cst_7 {dimension_numbers = #tpu.dot_dimension_numbers<[1], [0], [0], [1], [0, 0, 1, 1], [], []>} : vector<64x32xf32>, vector<32x128xf32>, vector<64x128xf32> -> vector<64x128xf32>
    %9 = arith.addf %6, %8 : vector<64x128xf32>
    %c0_8 = arith.constant 0 : index
    %c0_9 = arith.constant 0 : index
    %10 = vector.load %arg5[%c0_8, %c0_9] : memref<64x1xf32, #tpu.memory_space<vmem>>, vector<64x1xf32>
    %11 = vector.broadcast %10 : vector<64x1xf32> to vector<64x128xf32>
    %12 = arith.addf %9, %11 : vector<64x128xf32>
    %cst_10 = arith.constant 0.000000e+00 : f32
    %13 = vector.broadcast %cst_10 : f32 to vector<64x128xf32>
    %14 = arith.maximumf %12, %13 : vector<64x128xf32>
    %c0_11 = arith.constant 0 : index
    %c0_12 = arith.constant 0 : index
    %15 = vector.load %arg6[%c0_11, %c0_12] : memref<32x64xf32, #tpu.memory_space<vmem>>, vector<32x64xf32>
    %cst_13 = arith.constant dense<0.000000e+00> : vector<32x128xf32>
    %16 = tpu.matmul %15, %14, %cst_13 {dimension_numbers = #tpu.dot_dimension_numbers<[1], [0], [0], [1], [0, 0, 1, 1], [], []>} : vector<32x64xf32>, vector<64x128xf32>, vector<32x128xf32> -> vector<32x128xf32>
    %c0_14 = arith.constant 0 : index
    %c0_15 = arith.constant 0 : index
    %17 = vector.load %arg7[%c0_14, %c0_15] : memref<32x1xf32, #tpu.memory_space<vmem>>, vector<32x1xf32>
    %18 = vector.broadcast %17 : vector<32x1xf32> to vector<32x128xf32>
    %19 = arith.addf %16, %18 : vector<32x128xf32>
    %cst_16 = arith.constant 0.000000e+00 : f32
    %20 = vector.broadcast %cst_16 : f32 to vector<32x128xf32>
    %21 = arith.maximumf %19, %20 : vector<32x128xf32>
    %c0_17 = arith.constant 0 : index
    %c0_18 = arith.constant 0 : index
    %22 = vector.load %arg8[%c0_17, %c0_18] : memref<16x32xf32, #tpu.memory_space<vmem>>, vector<16x32xf32>
    %cst_19 = arith.constant dense<0.000000e+00> : vector<16x128xf32>
    %23 = tpu.matmul %22, %21, %cst_19 {dimension_numbers = #tpu.dot_dimension_numbers<[1], [0], [0], [1], [0, 0, 1, 1], [], []>} : vector<16x32xf32>, vector<32x128xf32>, vector<16x128xf32> -> vector<16x128xf32>
    %c0_20 = arith.constant 0 : index
    %c0_21 = arith.constant 0 : index
    %24 = vector.load %arg9[%c0_20, %c0_21] : memref<16x1xf32, #tpu.memory_space<vmem>>, vector<16x1xf32>
    %25 = vector.broadcast %24 : vector<16x1xf32> to vector<16x128xf32>
    %26 = arith.addf %23, %25 : vector<16x128xf32>
    %cst_22 = arith.constant 0.000000e+00 : f32
    %27 = vector.broadcast %cst_22 : f32 to vector<16x128xf32>
    %28 = arith.maximumf %26, %27 : vector<16x128xf32>
    %c0_23 = arith.constant 0 : index
    %c0_24 = arith.constant 0 : index
    %29 = vector.load %arg10[%c0_23, %c0_24] : memref<1x32xf32, #tpu.memory_space<vmem>>, vector<1x32xf32>
    %cst_25 = arith.constant dense<0.000000e+00> : vector<1x128xf32>
    %30 = tpu.matmul %29, %4, %cst_25 {dimension_numbers = #tpu.dot_dimension_numbers<[1], [0], [0], [1], [0, 0, 1, 1], [], []>} : vector<1x32xf32>, vector<32x128xf32>, vector<1x128xf32> -> vector<1x128xf32>
    %c0_26 = arith.constant 0 : index
    %c0_27 = arith.constant 0 : index
    %31 = vector.load %arg11[%c0_26, %c0_27] : memref<1x16xf32, #tpu.memory_space<vmem>>, vector<1x16xf32>
    %cst_28 = arith.constant dense<0.000000e+00> : vector<1x128xf32>
    %32 = tpu.matmul %31, %28, %cst_28 {dimension_numbers = #tpu.dot_dimension_numbers<[1], [0], [0], [1], [0, 0, 1, 1], [], []>} : vector<1x16xf32>, vector<16x128xf32>, vector<1x128xf32> -> vector<1x128xf32>
    %33 = arith.addf %30, %32 : vector<1x128xf32>
    %c0_29 = arith.constant 0 : index
    %c0_30 = arith.constant 0 : index
    %34 = vector.load %arg12[%c0_29, %c0_30] : memref<1x1xf32, #tpu.memory_space<vmem>>, vector<1x1xf32>
    %35 = vector.broadcast %34 : vector<1x1xf32> to vector<1x128xf32>
    %36 = arith.addf %33, %35 : vector<1x128xf32>
    %c0_31 = arith.constant 0 : index
    %c0_32 = arith.constant 0 : index
    %37 = vector.load %arg13[%c0_31, %c0_32] : memref<1x128xf32, #tpu.memory_space<vmem>>, vector<1x128xf32>
    tpu.vector_store %arg13[%c0_31, %c0_32], %36 {strides = array<i32>} : memref<1x128xf32, #tpu.memory_space<vmem>>, vector<1x128xf32>,
    return
  }
  func.func @transform_0(%arg0: i32) -> (i32, i32) {
    %c0_i32 = arith.constant 0 : i32
    %c0_i32_0 = arith.constant 0 : i32
    return %c0_i32, %arg0 : i32, i32
  }
  func.func @transform_1(%arg0: i32) -> (i32, i32) {
    %c0_i32 = arith.constant 0 : i32
    %c0_i32_0 = arith.constant 0 : i32
    return %c0_i32, %arg0 : i32, i32
  }
  func.func @transform_2(%arg0: i32) -> (i32, i32) {
    %c0_i32 = arith.constant 0 : i32
    %c0_i32_0 = arith.constant 0 : i32
    %c0_i32_1 = arith.constant 0 : i32
    return %c0_i32, %c0_i32_0 : i32, i32
  }
  func.func @transform_3(%arg0: i32) -> (i32, i32) {
    %c0_i32 = arith.constant 0 : i32
    %c0_i32_0 = arith.constant 0 : i32
    %c0_i32_1 = arith.constant 0 : i32
    return %c0_i32, %c0_i32_0 : i32, i32
  }
  func.func @transform_4(%arg0: i32) -> (i32, i32) {
    %c0_i32 = arith.constant 0 : i32
    %c0_i32_0 = arith.constant 0 : i32
    %c0_i32_1 = arith.constant 0 : i32
    return %c0_i32, %c0_i32_0 : i32, i32
  }
  func.func @transform_5(%arg0: i32) -> (i32, i32) {
    %c0_i32 = arith.constant 0 : i32
    %c0_i32_0 = arith.constant 0 : i32
    %c0_i32_1 = arith.constant 0 : i32
    return %c0_i32, %c0_i32_0 : i32, i32
  }
  func.func @transform_6(%arg0: i32) -> (i32, i32) {
    %c0_i32 = arith.constant 0 : i32
    %c0_i32_0 = arith.constant 0 : i32
    %c0_i32_1 = arith.constant 0 : i32
    return %c0_i32, %c0_i32_0 : i32, i32
  }
  func.func @transform_7(%arg0: i32) -> (i32, i32) {
    %c0_i32 = arith.constant 0 : i32
    %c0_i32_0 = arith.constant 0 : i32
    %c0_i32_1 = arith.constant 0 : i32
    return %c0_i32, %c0_i32_0 : i32, i32
  }
  func.func @transform_8(%arg0: i32) -> (i32, i32) {
    %c0_i32 = arith.constant 0 : i32
    %c0_i32_0 = arith.constant 0 : i32
    %c0_i32_1 = arith.constant 0 : i32
    return %c0_i32, %c0_i32_0 : i32, i32
  }
  func.func @transform_9(%arg0: i32) -> (i32, i32) {
    %c0_i32 = arith.constant 0 : i32
    %c0_i32_0 = arith.constant 0 : i32
    %c0_i32_1 = arith.constant 0 : i32
    return %c0_i32, %c0_i32_0 : i32, i32
  }
  func.func @transform_10(%arg0: i32) -> (i32, i32) {
    %c0_i32 = arith.constant 0 : i32
    %c0_i32_0 = arith.constant 0 : i32
    %c0_i32_1 = arith.constant 0 : i32
    return %c0_i32, %c0_i32_0 : i32, i32
  }
  func.func @transform_11(%arg0: i32) -> (i32, i32) {
    %c0_i32 = arith.constant 0 : i32
    %c0_i32_0 = arith.constant 0 : i32
    %c0_i32_1 = arith.constant 0 : i32
    return %c0_i32, %c0_i32_0 : i32, i32
  }
  func.func @transform_12(%arg0: i32) -> (i32, i32) {
    %c0_i32 = arith.constant 0 : i32
    %c0_i32_0 = arith.constant 0 : i32
    return %c0_i32, %arg0 : i32, i32
  }
}

</mosaic_0001>

<llo_original>
// kernel: tpu_custom_call.1
$region0: #{tpu_custom_call.1}
  #allocation0 [shape = 'u32[]', space=smem, size = 0x4, offset = 0x4, fixed_abs, tag = 'smem constant byte address 0x4 - core index']
  #allocation1 [shape = 'u32[144,128]{1,0:T(1,128)}', space=vmem, size = 0x12000, scoped, tag = 'internal scratch']
  #allocation2 [shape = 'f32[1,1]{1,0:T(1,128)S(1)}', space=vmem, size = 0x200, scoped, tag = 'scoped memory for tpu_custom_call.1']
  %s0 = inlined_call_operand.vmem [shape: bf16[32,128], index: 0, kind: input, shape index: {}]
  %s1 = inlined_call_operand.vmem [shape: bf16[32,128], index: 1, kind: input, shape index: {}]
  %s2 = inlined_call_operand.vmem [shape: f32[64,32], index: 2, kind: input, shape index: {}]
  %s3 = inlined_call_operand.vmem [shape: f32[64,32], index: 3, kind: input, shape index: {}]
  %s4 = inlined_call_operand.vmem [shape: f32[64,1], index: 4, kind: input, shape index: {}]
  %s5 = inlined_call_operand.vmem [shape: f32[32,64], index: 5, kind: input, shape index: {}]
  %s6 = inlined_call_operand.vmem [shape: f32[32,1], index: 6, kind: input, shape index: {}]
  %s7 = inlined_call_operand.vmem [shape: f32[16,32], index: 7, kind: input, shape index: {}]
  %s8 = inlined_call_operand.vmem [shape: f32[16,1], index: 8, kind: input, shape index: {}]
  %s9 = inlined_call_operand.vmem [shape: f32[1,32], index: 9, kind: input, shape index: {}]
  %s10 = inlined_call_operand.vmem [shape: f32[1,16], index: 10, kind: input, shape index: {}]
  %s11 = inlined_call_operand.<no memory space> [shape: f32[1,1], index: 11, kind: input, shape index: {}]
  %s12 = inlined_call_operand.hbm [shape: f32[1,128], index: 12, kind: output, shape index: {}]
  %s13 = sld [smem:[#allocation0]]
  $region58: #{tpu_custom_call.1} parent=0
    _
  %s15 = ssub.s32 1, %s13
  %s16 = scalar_select 0, %s15, %s13
  %v17 = vstv %s11
  %18 = vst [vmem:[#allocation2] sm:$0x1] %v17
  $region1: #{tpu_custom_call.1} parent=0
    #allocation3 [shape = 'u8[512]{0}', space=vmem, size = 0x400, scoped, tag = 'output window, operand 0, single buffered']
    #allocation4 [shape = 's32[1]{0}', space=sflag, size = 0x4, scoped, tag = 'scoped memory for tpu_custom_call.1']
    %19 = vsyncpa [#allocation4], 0
    // Predicated region
    $region2: #{tpu_custom_call.1} parent=1 // pred_check
      _
    $region3: #{tpu_custom_call.1} parent=1 // pred_check_branch
      %21 = sbr.rel (0) target = $region5
    $region4: #{tpu_custom_call.1} parent=1 // pred_region
      _
    $region5: #{tpu_custom_call.1} parent=1 // pred_fallthru
      _
    // Predicated region
    $region6: #{tpu_custom_call.1} parent=1 // pred_check
      _
    $region7: #{tpu_custom_call.1} parent=1 // pred_check_branch
      %23 = sbr.rel (0) target = $region9
    $region8: #{tpu_custom_call.1} parent=1 // pred_region
      _
    $region9: #{tpu_custom_call.1} parent=1 // pred_fallthru
      _
    // Predicated region
    $region10: #{tpu_custom_call.1} parent=1 // pred_check
      _
    $region11: #{tpu_custom_call.1} parent=1 // pred_check_branch
      %25 = sbr.rel (0) target = $region13
    $region12: #{tpu_custom_call.1} parent=1 // pred_region
      _
    $region13: #{tpu_custom_call.1} parent=1 // pred_fallthru
      _
    // Predicated region
    $region14: #{tpu_custom_call.1} parent=1 // pred_check
      _
    $region15: #{tpu_custom_call.1} parent=1 // pred_check_branch
      %27 = sbr.rel (0) target = $region17
    $region16: #{tpu_custom_call.1} parent=1 // pred_region
      _
    $region17: #{tpu_custom_call.1} parent=1 // pred_fallthru
      _
    // Predicated region
    $region18: #{tpu_custom_call.1} parent=1 // pred_check
      _
    $region19: #{tpu_custom_call.1} parent=1 // pred_check_branch
      %29 = sbr.rel (0) target = $region21
    $region20: #{tpu_custom_call.1} parent=1 // pred_region
      _
    $region21: #{tpu_custom_call.1} parent=1 // pred_fallthru
      _
    // Predicated region
    $region22: #{tpu_custom_call.1} parent=1 // pred_check
      _
    $region23: #{tpu_custom_call.1} parent=1 // pred_check_branch
      %31 = sbr.rel (0) target = $region25
    $region24: #{tpu_custom_call.1} parent=1 // pred_region
      _
    $region25: #{tpu_custom_call.1} parent=1 // pred_fallthru
      _
    // Predicated region
    $region26: #{tpu_custom_call.1} parent=1 // pred_check
      _
    $region27: #{tpu_custom_call.1} parent=1 // pred_check_branch
      %33 = sbr.rel (0) target = $region29
    $region28: #{tpu_custom_call.1} parent=1 // pred_region
      _
    $region29: #{tpu_custom_call.1} parent=1 // pred_fallthru
      _
    // Predicated region
    $region30: #{tpu_custom_call.1} parent=1 // pred_check
      _
    $region31: #{tpu_custom_call.1} parent=1 // pred_check_branch
      %35 = sbr.rel (0) target = $region33
    $region32: #{tpu_custom_call.1} parent=1 // pred_region
      _
    $region33: #{tpu_custom_call.1} parent=1 // pred_fallthru
      _
    // Predicated region
    $region34: #{tpu_custom_call.1} parent=1 // pred_check
      _
    $region35: #{tpu_custom_call.1} parent=1 // pred_check_branch
      %37 = sbr.rel (0) target = $region37
    $region36: #{tpu_custom_call.1} parent=1 // pred_region
      _
    $region37: #{tpu_custom_call.1} parent=1 // pred_fallthru
      _
    // Predicated region
    $region38: #{tpu_custom_call.1} parent=1 // pred_check
      _
    $region39: #{tpu_custom_call.1} parent=1 // pred_check_branch
      %39 = sbr.rel (0) target = $region41
    $region40: #{tpu_custom_call.1} parent=1 // pred_region
      _
    $region41: #{tpu_custom_call.1} parent=1 // pred_fallthru
      _
    // Predicated region
    $region42: #{tpu_custom_call.1} parent=1 // pred_check
      _
    $region43: #{tpu_custom_call.1} parent=1 // pred_check_branch
      %41 = sbr.rel (0) target = $region45
    $region44: #{tpu_custom_call.1} parent=1 // pred_region
      _
    $region45: #{tpu_custom_call.1} parent=1 // pred_fallthru
      _
    // Predicated region
    $region46: #{tpu_custom_call.1} parent=1 // pred_check
      _
    $region47: #{tpu_custom_call.1} parent=1 // pred_check_branch
      %43 = sbr.rel (0) target = $region49
    $region48: #{tpu_custom_call.1} parent=1 // pred_region
      _
    $region49: #{tpu_custom_call.1} parent=1 // pred_fallthru
      _
    %v44 = vld [vmem:[%s0] sm:$0xf]
    %v45 = vld [vmem:[%s0 + $0x4] sm:$0xf]
    %v46 = vld [vmem:[%s0 + $0x8] sm:$0xf]
    %v47 = vld [vmem:[%s0 + $0xc] sm:$0xf]
    %v48 = vunpack.c.l.bf16 %v44
    %v49 = vunpack.c.l.bf16 %v45
    %v50 = vunpack.c.l.bf16 %v46
    %v51 = vunpack.c.l.bf16 %v47
    %v52 = vld [vmem:[%s1] sm:$0xf]
    %v53 = vld [vmem:[%s1 + $0x4] sm:$0xf]
    %v54 = vld [vmem:[%s1 + $0x8] sm:$0xf]
    %v55 = vld [vmem:[%s1 + $0xc] sm:$0xf]
    %v56 = vunpack.c.l.bf16 %v52
    %v57 = vunpack.c.l.bf16 %v53
    %v58 = vunpack.c.l.bf16 %v54
    %v59 = vunpack.c.l.bf16 %v55
    %v60 = vmul.f32 %v48, %v56
    %v61 = vmul.f32 %v49, %v57
    %v62 = vmul.f32 %v50, %v58
    %v63 = vmul.f32 %v51, %v59
    %v64 = vld [vmem:[%s2] sm:$0xff]
    %v65 = vld [vmem:[%s2 + $0x8] sm:$0xff]
    %v66 = vld [vmem:[%s2 + $0x10] sm:$0xff]
    %v67 = vld [vmem:[%s2 + $0x18] sm:$0xff]
    %v68 = vld [vmem:[%s2 + $0x20] sm:$0xff]
    %v69 = vld [vmem:[%s2 + $0x28] sm:$0xff]
    %v70 = vld [vmem:[%s2 + $0x30] sm:$0xff]
    %v71 = vld [vmem:[%s2 + $0x38] sm:$0xff]
    %v72 = vld [vmem:[%s3] sm:$0xff]
    %v73 = vld [vmem:[%s3 + $0x8] sm:$0xff]
    %v74 = vld [vmem:[%s3 + $0x10] sm:$0xff]
    %v75 = vld [vmem:[%s3 + $0x18] sm:$0xff]
    %v76 = vld [vmem:[%s3 + $0x20] sm:$0xff]
    %v77 = vld [vmem:[%s3 + $0x28] sm:$0xff]
    %v78 = vld [vmem:[%s3 + $0x30] sm:$0xff]
    %v79 = vld [vmem:[%s3 + $0x38] sm:$0xff]
    %vm80 = vcmask 261120
    %v82 = vsel %vm80, %v72, 0
    %v85 = vsel %vm80, %v73, 0
    %v88 = vsel %vm80, %v74, 0
    %v91 = vsel %vm80, %v75, 0
    %v94 = vsel %vm80, %v76, 0
    %v97 = vsel %vm80, %v77, 0
    %v100 = vsel %vm80, %v78, 0
    %v103 = vsel %vm80, %v79, 0
    %105 = vmatprep.subr.mxu0 0.0
    %106 = vmatpush1.msra.mxu0 0.0
    %107 = vmatprep.subr.mxu0 0.0
    %108 = vmatpush1.msra.mxu0 0.0
    %109 = vmatprep.subr.mxu0 0.0
    %110 = vmatpush1.msra.mxu0 0.0
    %111 = vmatprep.subr.mxu0 0.0
    %112 = vmatpush1.msra.mxu0 0.0
    %113 = vmatprep.subr.mxu0 0.0
    %114 = vmatpush1.msra.mxu0 0.0
    %115 = vmatprep.subr.mxu0 0.0
    %116 = vmatpush1.msra.mxu0 0.0
    %117 = vmatprep.subr.mxu0 0.0
    %118 = vmatpush1.msra.mxu0 0.0
    %119 = vmatprep.subr.mxu0 0.0
    %120 = vmatpush1.msra.mxu0 0.0
    %121 = vmatprep.subr.mxu0 0.0
    %122 = vmatpush1.msra.mxu0 0.0
    %123 = vmatprep.subr.mxu0 0.0
    %124 = vmatpush1.msra.mxu0 0.0
    %125 = vmatprep.subr.mxu0 0.0
    %126 = vmatpush1.msra.mxu0 0.0
    %127 = vmatprep.subr.mxu0 0.0
    %128 = vmatpush1.msra.mxu0 0.0
    %129 = vmatprep.subr.mxu0 0.0
    %130 = vmatpush1.msra.mxu0 %v59
    %131 = vmatprep.subr.mxu0 0.0
    %132 = vmatpush1.msra.mxu0 %v58
    %133 = vmatprep.subr.mxu0 0.0
    %134 = vmatpush1.msra.mxu0 %v57
    %135 = vmatprep.subr.mxu0 0.0
    %136 = vmatpush1.msra.mxu0 %v56
    %137 = vmatprep.subr.mxu0 0.0
    %138 = vmatpush2.msra.mxu0 0.0
    %139 = vmatprep.subr.mxu0 0.0
    %140 = vmatpush2.msra.mxu0 0.0
    %141 = vmatprep.subr.mxu0 0.0
    %142 = vmatpush2.msra.mxu0 0.0
    %143 = vmatprep.subr.mxu0 0.0
    %144 = vmatpush2.msra.mxu0 0.0
    %145 = vmatprep.subr.mxu0 0.0
    %146 = vmatpush2.msra.mxu0 0.0
    %147 = vmatprep.subr.mxu0 0.0
    %148 = vmatpush2.msra.mxu0 0.0
    %149 = vmatprep.subr.mxu0 0.0
    %150 = vmatpush2.msra.mxu0 0.0
    %151 = vmatprep.subr.mxu0 0.0
    %152 = vmatpush2.msra.mxu0 0.0
    %153 = vmatprep.subr.mxu0 0.0
    %154 = vmatpush2.msra.mxu0 0.0
    %155 = vmatprep.subr.mxu0 0.0
    %156 = vmatpush2.msra.mxu0 0.0
    %157 = vmatprep.subr.mxu0 0.0
    %158 = vmatpush2.msra.mxu0 0.0
    %159 = vmatprep.subr.mxu0 0.0
    %160 = vmatpush2.msra.mxu0 0.0
    %161 = vmatprep.subr.mxu0 0.0
    %162 = vmatpush2.msra.mxu0 0.0
    %163 = vmatprep.subr.mxu0 0.0
    %164 = vmatpush2.msra.mxu0 0.0
    %165 = vmatprep.subr.mxu0 0.0
    %166 = vmatpush2.msra.mxu0 0.0
    %167 = vmatprep.subr.mxu0 0.0
    %168 = vmatpush2.msra.mxu0 0.0
    %169 = vmatprep.mubr.f32.mxu0 0.0
    %170 = vmatmul.mubr.f32.gmra.mxu0 %v82
    %v171 = vpop.f32.mrf.mxu0
    %v172 = vadd.f32 0.0, %v171
    %v173 = vpop.f32.mrf.mxu0
    %174 = vmatprep.mubr.f32.mxu0 0.0
    %175 = vmatmul.mubr.f32.gmra.mxu0 %v85
    %v176 = vpop.f32.mrf.mxu0
    %v177 = vadd.f32 0.0, %v176
    %v178 = vpop.f32.mrf.mxu0
    %179 = vmatprep.mubr.f32.mxu0 0.0
    %180 = vmatmul.mubr.f32.gmra.mxu0 %v88
    %v181 = vpop.f32.mrf.mxu0
    %v182 = vadd.f32 0.0, %v181
    %v183 = vpop.f32.mrf.mxu0
    %184 = vmatprep.mubr.f32.mxu0 0.0
    %185 = vmatmul.mubr.f32.gmra.mxu0 %v91
    %v186 = vpop.f32.mrf.mxu0
    %v187 = vadd.f32 0.0, %v186
    %v188 = vpop.f32.mrf.mxu0
    %189 = vmatprep.mubr.f32.mxu0 0.0
    %190 = vmatmul.mubr.f32.gmra.mxu0 %v94
    %v191 = vpop.f32.mrf.mxu0
    %v192 = vadd.f32 0.0, %v191
    %v193 = vpop.f32.mrf.mxu0
    %194 = vmatprep.mubr.f32.mxu0 0.0
    %195 = vmatmul.mubr.f32.gmra.mxu0 %v97
    %v196 = vpop.f32.mrf.mxu0
    %v197 = vadd.f32 0.0, %v196
    %v198 = vpop.f32.mrf.mxu0
    %199 = vmatprep.mubr.f32.mxu0 0.0
    %200 = vmatmul.mubr.f32.gmra.mxu0 %v100
    %v201 = vpop.f32.mrf.mxu0
    %v202 = vadd.f32 0.0, %v201
    %v203 = vpop.f32.mrf.mxu0
    %204 = vmatprep.mubr.f32.mxu0 0.0
    %205 = vmatmul.mubr.f32.gmra.mxu0 %v103
    %v206 = vpop.f32.mrf.mxu0
    %v207 = vadd.f32 0.0, %v206
    %v208 = vpop.f32.mrf.mxu0
    %209 = vdwg.mxu0
    %v211 = vsel %vm80, %v64, 0
    %v214 = vsel %vm80, %v65, 0
    %v217 = vsel %vm80, %v66, 0
    %v220 = vsel %vm80, %v67, 0
    %v223 = vsel %vm80, %v68, 0
    %v226 = vsel %vm80, %v69, 0
    %v229 = vsel %vm80, %v70, 0
    %v232 = vsel %vm80, %v71, 0
    %234 = vmatprep.subr.mxu0 0.0
    %235 = vmatpush1.msra.mxu0 0.0
    %236 = vmatprep.subr.mxu0 0.0
    %237 = vmatpush1.msra.mxu0 0.0
    %238 = vmatprep.subr.mxu0 0.0
    %239 = vmatpush1.msra.mxu0 0.0
    %240 = vmatprep.subr.mxu0 0.0
    %241 = vmatpush1.msra.mxu0 0.0
    %242 = vmatprep.subr.mxu0 0.0
    %243 = vmatpush1.msra.mxu0 0.0
    %244 = vmatprep.subr.mxu0 0.0
    %245 = vmatpush1.msra.mxu0 0.0
    %246 = vmatprep.subr.mxu0 0.0
    %247 = vmatpush1.msra.mxu0 0.0
    %248 = vmatprep.subr.mxu0 0.0
    %249 = vmatpush1.msra.mxu0 0.0
    %250 = vmatprep.subr.mxu0 0.0
    %251 = vmatpush1.msra.mxu0 0.0
    %252 = vmatprep.subr.mxu0 0.0
    %253 = vmatpush1.msra.mxu0 0.0
    %254 = vmatprep.subr.mxu0 0.0
    %255 = vmatpush1.msra.mxu0 0.0
    %256 = vmatprep.subr.mxu0 0.0
    %257 = vmatpush1.msra.mxu0 0.0
    %258 = vmatprep.subr.mxu0 0.0
    %259 = vmatpush1.msra.mxu0 %v51
    %260 = vmatprep.subr.mxu0 0.0
    %261 = vmatpush1.msra.mxu0 %v50
    %262 = vmatprep.subr.mxu0 0.0
    %263 = vmatpush1.msra.mxu0 %v49
    %264 = vmatprep.subr.mxu0 0.0
    %265 = vmatpush1.msra.mxu0 %v48
    %266 = vmatprep.subr.mxu0 0.0
    %267 = vmatpush2.msra.mxu0 0.0
    %268 = vmatprep.subr.mxu0 0.0
    %269 = vmatpush2.msra.mxu0 0.0
    %270 = vmatprep.subr.mxu0 0.0
    %271 = vmatpush2.msra.mxu0 0.0
    %272 = vmatprep.subr.mxu0 0.0
    %273 = vmatpush2.msra.mxu0 0.0
    %274 = vmatprep.subr.mxu0 0.0
    %275 = vmatpush2.msra.mxu0 0.0
    %276 = vmatprep.subr.mxu0 0.0
    %277 = vmatpush2.msra.mxu0 0.0
    %278 = vmatprep.subr.mxu0 0.0
    %279 = vmatpush2.msra.mxu0 0.0
    %280 = vmatprep.subr.mxu0 0.0
    %281 = vmatpush2.msra.mxu0 0.0
    %282 = vmatprep.subr.mxu0 0.0
    %283 = vmatpush2.msra.mxu0 0.0
    %284 = vmatprep.subr.mxu0 0.0
    %285 = vmatpush2.msra.mxu0 0.0
    %286 = vmatprep.subr.mxu0 0.0
    %287 = vmatpush2.msra.mxu0 0.0
    %288 = vmatprep.subr.mxu0 0.0
    %289 = vmatpush2.msra.mxu0 0.0
    %290 = vmatprep.subr.mxu0 0.0
    %291 = vmatpush2.msra.mxu0 0.0
    %292 = vmatprep.subr.mxu0 0.0
    %293 = vmatpush2.msra.mxu0 0.0
    %294 = vmatprep.subr.mxu0 0.0
    %295 = vmatpush2.msra.mxu0 0.0
    %296 = vmatprep.subr.mxu0 0.0
    %297 = vmatpush2.msra.mxu0 0.0
    %298 = vmatprep.mubr.f32.mxu0 0.0
    %299 = vmatmul.mubr.f32.gmra.mxu0 %v211
    %v300 = vpop.f32.mrf.mxu0
    %v301 = vadd.f32 %v172, %v300
    %v302 = vpop.f32.mrf.mxu0
    %303 = vmatprep.mubr.f32.mxu0 0.0
    %304 = vmatmul.mubr.f32.gmra.mxu0 %v214
    %v305 = vpop.f32.mrf.mxu0
    %v306 = vadd.f32 %v177, %v305
    %v307 = vpop.f32.mrf.mxu0
    %308 = vmatprep.mubr.f32.mxu0 0.0
    %309 = vmatmul.mubr.f32.gmra.mxu0 %v217
    %v310 = vpop.f32.mrf.mxu0
    %v311 = vadd.f32 %v182, %v310
    %v312 = vpop.f32.mrf.mxu0
    %313 = vmatprep.mubr.f32.mxu0 0.0
    %314 = vmatmul.mubr.f32.gmra.mxu0 %v220
    %v315 = vpop.f32.mrf.mxu0
    %v316 = vadd.f32 %v187, %v315
    %v317 = vpop.f32.mrf.mxu0
    %318 = vmatprep.mubr.f32.mxu0 0.0
    %319 = vmatmul.mubr.f32.gmra.mxu0 %v223
    %v320 = vpop.f32.mrf.mxu0
    %v321 = vadd.f32 %v192, %v320
    %v322 = vpop.f32.mrf.mxu0
    %323 = vmatprep.mubr.f32.mxu0 0.0
    %324 = vmatmul.mubr.f32.gmra.mxu0 %v226
    %v325 = vpop.f32.mrf.mxu0
    %v326 = vadd.f32 %v197, %v325
    %v327 = vpop.f32.mrf.mxu0
    %328 = vmatprep.mubr.f32.mxu0 0.0
    %329 = vmatmul.mubr.f32.gmra.mxu0 %v229
    %v330 = vpop.f32.mrf.mxu0
    %v331 = vadd.f32 %v202, %v330
    %v332 = vpop.f32.mrf.mxu0
    %333 = vmatprep.mubr.f32.mxu0 0.0
    %334 = vmatmul.mubr.f32.gmra.mxu0 %v232
    %v335 = vpop.f32.mrf.mxu0
    %v336 = vadd.f32 %v207, %v335
    %v337 = vpop.f32.mrf.mxu0
    %338 = vdwg.mxu0
    %v339 = vld [vmem:[%s4] sm:$0xff]
    %v340 = vld [vmem:[%s4 + $0x8] sm:$0xff]
    %v341 = vld [vmem:[%s4 + $0x10] sm:$0xff]
    %v342 = vld [vmem:[%s4 + $0x18] sm:$0xff]
    %v343 = vld [vmem:[%s4 + $0x20] sm:$0xff]
    %v344 = vld [vmem:[%s4 + $0x28] sm:$0xff]
    %v345 = vld [vmem:[%s4 + $0x30] sm:$0xff]
    %v346 = vld [vmem:[%s4 + $0x38] sm:$0xff]
    %348 = vset.pattern.permute.xlu0 0
    %349 = vperm.xlu0 %348, %v339
    %v350 = vpop.permute.xlu0 %349
    %353 = vset.pattern.permute.xlu0 0
    %354 = vperm.xlu0 %353, %v340
    %v355 = vpop.permute.xlu0 %354
    %358 = vset.pattern.permute.xlu0 0
    %359 = vperm.xlu0 %358, %v341
    %v360 = vpop.permute.xlu0 %359
    %363 = vset.pattern.permute.xlu0 0
    %364 = vperm.xlu0 %363, %v342
    %v365 = vpop.permute.xlu0 %364
    %368 = vset.pattern.permute.xlu0 0
    %369 = vperm.xlu0 %368, %v343
    %v370 = vpop.permute.xlu0 %369
    %373 = vset.pattern.permute.xlu0 0
    %374 = vperm.xlu0 %373, %v344
    %v375 = vpop.permute.xlu0 %374
    %378 = vset.pattern.permute.xlu0 0
    %379 = vperm.xlu0 %378, %v345
    %v380 = vpop.permute.xlu0 %379
    %383 = vset.pattern.permute.xlu0 0
    %384 = vperm.xlu0 %383, %v346
    %v385 = vpop.permute.xlu0 %384
    %v387 = vadd.f32 %v301, %v350
    %v388 = vadd.f32 %v306, %v355
    %v389 = vadd.f32 %v311, %v360
    %v390 = vadd.f32 %v316, %v365
    %v391 = vadd.f32 %v321, %v370
    %v392 = vadd.f32 %v326, %v375
    %v393 = vadd.f32 %v331, %v380
    %v394 = vadd.f32 %v336, %v385
    %v395 = vmax.f32 %v387, 0.0
    %v396 = vmax.f32 %v388, 0.0
    %v397 = vmax.f32 %v389, 0.0
    %v398 = vmax.f32 %v390, 0.0
    %v399 = vmax.f32 %v391, 0.0
    %v400 = vmax.f32 %v392, 0.0
    %v401 = vmax.f32 %v393, 0.0
    %v402 = vmax.f32 %v394, 0.0
    %v403 = vld [vmem:[%s5] sm:$0xff]
    %v404 = vld [vmem:[%s5 + $0x8] sm:$0xff]
    %v405 = vld [vmem:[%s5 + $0x10] sm:$0xff]
    %v406 = vld [vmem:[%s5 + $0x18] sm:$0xff]
    %v407 = vld [vmem:[%s6] sm:$0xff]
    %v408 = vld [vmem:[%s6 + $0x8] sm:$0xff]
    %v409 = vld [vmem:[%s6 + $0x10] sm:$0xff]
    %v410 = vld [vmem:[%s6 + $0x18] sm:$0xff]
    %412 = vset.pattern.permute.xlu0 0
    %413 = vperm.xlu0 %412, %v407
    %v414 = vpop.permute.xlu0 %413
    %417 = vset.pattern.permute.xlu0 0
    %418 = vperm.xlu0 %417, %v408
    %v419 = vpop.permute.xlu0 %418
    %422 = vset.pattern.permute.xlu0 0
    %423 = vperm.xlu0 %422, %v409
    %v424 = vpop.permute.xlu0 %423
    %427 = vset.pattern.permute.xlu0 0
    %428 = vperm.xlu0 %427, %v410
    %v429 = vpop.permute.xlu0 %428
    %vm431 = vcmask 523264
    %v433 = vsel %vm431, %v403, 0
    %v436 = vsel %vm431, %v404, 0
    %v439 = vsel %vm431, %v405, 0
    %v442 = vsel %vm431, %v406, 0
    %444 = vmatprep.subr.mxu0 0.0
    %445 = vmatpush1.msra.mxu0 0.0
    %446 = vmatprep.subr.mxu0 0.0
    %447 = vmatpush1.msra.mxu0 0.0
    %448 = vmatprep.subr.mxu0 0.0
    %449 = vmatpush1.msra.mxu0 0.0
    %450 = vmatprep.subr.mxu0 0.0
    %451 = vmatpush1.msra.mxu0 0.0
    %452 = vmatprep.subr.mxu0 0.0
    %453 = vmatpush1.msra.mxu0 0.0
    %454 = vmatprep.subr.mxu0 0.0
    %455 = vmatpush1.msra.mxu0 0.0
    %456 = vmatprep.subr.mxu0 0.0
    %457 = vmatpush1.msra.mxu0 0.0
    %458 = vmatprep.subr.mxu0 0.0
    %459 = vmatpush1.msra.mxu0 0.0
    %460 = vmatprep.subr.mxu0 0.0
    %461 = vmatpush1.msra.mxu0 %v402
    %462 = vmatprep.subr.mxu0 0.0
    %463 = vmatpush1.msra.mxu0 %v401
    %464 = vmatprep.subr.mxu0 0.0
    %465 = vmatpush1.msra.mxu0 %v400
    %466 = vmatprep.subr.mxu0 0.0
    %467 = vmatpush1.msra.mxu0 %v399
    %468 = vmatprep.subr.mxu0 0.0
    %469 = vmatpush1.msra.mxu0 %v398
    %470 = vmatprep.subr.mxu0 0.0
    %471 = vmatpush1.msra.mxu0 %v397
    %472 = vmatprep.subr.mxu0 0.0
    %473 = vmatpush1.msra.mxu0 %v396
    %474 = vmatprep.subr.mxu0 0.0
    %475 = vmatpush1.msra.mxu0 %v395
    %476 = vmatprep.subr.mxu0 0.0
    %477 = vmatpush2.msra.mxu0 0.0
    %478 = vmatprep.subr.mxu0 0.0
    %479 = vmatpush2.msra.mxu0 0.0
    %480 = vmatprep.subr.mxu0 0.0
    %481 = vmatpush2.msra.mxu0 0.0
    %482 = vmatprep.subr.mxu0 0.0
    %483 = vmatpush2.msra.mxu0 0.0
    %484 = vmatprep.subr.mxu0 0.0
    %485 = vmatpush2.msra.mxu0 0.0
    %486 = vmatprep.subr.mxu0 0.0
    %487 = vmatpush2.msra.mxu0 0.0
    %488 = vmatprep.subr.mxu0 0.0
    %489 = vmatpush2.msra.mxu0 0.0
    %490 = vmatprep.subr.mxu0 0.0
    %491 = vmatpush2.msra.mxu0 0.0
    %492 = vmatprep.subr.mxu0 0.0
    %493 = vmatpush2.msra.mxu0 0.0
    %494 = vmatprep.subr.mxu0 0.0
    %495 = vmatpush2.msra.mxu0 0.0
    %496 = vmatprep.subr.mxu0 0.0
    %497 = vmatpush2.msra.mxu0 0.0
    %498 = vmatprep.subr.mxu0 0.0
    %499 = vmatpush2.msra.mxu0 0.0
    %500 = vmatprep.subr.mxu0 0.0
    %501 = vmatpush2.msra.mxu0 0.0
    %502 = vmatprep.subr.mxu0 0.0
    %503 = vmatpush2.msra.mxu0 0.0
    %504 = vmatprep.subr.mxu0 0.0
    %505 = vmatpush2.msra.mxu0 0.0
    %506 = vmatprep.subr.mxu0 0.0
    %507 = vmatpush2.msra.mxu0 0.0
    %508 = vmatprep.mubr.f32.mxu0 0.0
    %509 = vmatmul.mubr.f32.gmra.mxu0 %v433
    %v510 = vpop.f32.mrf.mxu0
    %v511 = vadd.f32 %v414, %v510
    %v512 = vpop.f32.mrf.mxu0
    %513 = vmatprep.mubr.f32.mxu0 0.0
    %514 = vmatmul.mubr.f32.gmra.mxu0 %v436
    %v515 = vpop.f32.mrf.mxu0
    %v516 = vadd.f32 %v419, %v515
    %v517 = vpop.f32.mrf.mxu0
    %518 = vmatprep.mubr.f32.mxu0 0.0
    %519 = vmatmul.mubr.f32.gmra.mxu0 %v439
    %v520 = vpop.f32.mrf.mxu0
    %v521 = vadd.f32 %v424, %v520
    %v522 = vpop.f32.mrf.mxu0
    %523 = vmatprep.mubr.f32.mxu0 0.0
    %524 = vmatmul.mubr.f32.gmra.mxu0 %v442
    %v525 = vpop.f32.mrf.mxu0
    %v526 = vadd.f32 %v429, %v525
    %v527 = vpop.f32.mrf.mxu0
    %528 = vdwg.mxu0
    %v529 = vmax.f32 %v511, 0.0
    %v530 = vmax.f32 %v516, 0.0
    %v531 = vmax.f32 %v521, 0.0
    %v532 = vmax.f32 %v526, 0.0
    %v533 = vld [vmem:[%s7] sm:$0xff]
    %v534 = vld [vmem:[%s7 + $0x8] sm:$0xff]
    %v535 = vld [vmem:[%s8] sm:$0xff]
    %v536 = vld [vmem:[%s8 + $0x8] sm:$0xff]
    %538 = vset.pattern.permute.xlu0 0
    %539 = vperm.xlu0 %538, %v535
    %v540 = vpop.permute.xlu0 %539
    %543 = vset.pattern.permute.xlu0 0
    %544 = vperm.xlu0 %543, %v536
    %v545 = vpop.permute.xlu0 %544
    %v548 = vsel %vm80, %v533, 0
    %v551 = vsel %vm80, %v534, 0
    %553 = vmatprep.subr.mxu0 0.0
    %554 = vmatpush1.msra.mxu0 0.0
    %555 = vmatprep.subr.mxu0 0.0
    %556 = vmatpush1.msra.mxu0 0.0
    %557 = vmatprep.subr.mxu0 0.0
    %558 = vmatpush1.msra.mxu0 0.0
    %559 = vmatprep.subr.mxu0 0.0
    %560 = vmatpush1.msra.mxu0 0.0
    %561 = vmatprep.subr.mxu0 0.0
    %562 = vmatpush1.msra.mxu0 0.0
    %563 = vmatprep.subr.mxu0 0.0
    %564 = vmatpush1.msra.mxu0 0.0
    %565 = vmatprep.subr.mxu0 0.0
    %566 = vmatpush1.msra.mxu0 0.0
    %567 = vmatprep.subr.mxu0 0.0
    %568 = vmatpush1.msra.mxu0 0.0
    %569 = vmatprep.subr.mxu0 0.0
    %570 = vmatpush1.msra.mxu0 0.0
    %571 = vmatprep.subr.mxu0 0.0
    %572 = vmatpush1.msra.mxu0 0.0
    %573 = vmatprep.subr.mxu0 0.0
    %574 = vmatpush1.msra.mxu0 0.0
    %575 = vmatprep.subr.mxu0 0.0
    %576 = vmatpush1.msra.mxu0 0.0
    %577 = vmatprep.subr.mxu0 0.0
    %578 = vmatpush1.msra.mxu0 %v532
    %579 = vmatprep.subr.mxu0 0.0
    %580 = vmatpush1.msra.mxu0 %v531
    %581 = vmatprep.subr.mxu0 0.0
    %582 = vmatpush1.msra.mxu0 %v530
    %583 = vmatprep.subr.mxu0 0.0
    %584 = vmatpush1.msra.mxu0 %v529
    %585 = vmatprep.subr.mxu0 0.0
    %586 = vmatpush2.msra.mxu0 0.0
    %587 = vmatprep.subr.mxu0 0.0
    %588 = vmatpush2.msra.mxu0 0.0
    %589 = vmatprep.subr.mxu0 0.0
    %590 = vmatpush2.msra.mxu0 0.0
    %591 = vmatprep.subr.mxu0 0.0
    %592 = vmatpush2.msra.mxu0 0.0
    %593 = vmatprep.subr.mxu0 0.0
    %594 = vmatpush2.msra.mxu0 0.0
    %595 = vmatprep.subr.mxu0 0.0
    %596 = vmatpush2.msra.mxu0 0.0
    %597 = vmatprep.subr.mxu0 0.0
    %598 = vmatpush2.msra.mxu0 0.0
    %599 = vmatprep.subr.mxu0 0.0
    %600 = vmatpush2.msra.mxu0 0.0
    %601 = vmatprep.subr.mxu0 0.0
    %602 = vmatpush2.msra.mxu0 0.0
    %603 = vmatprep.subr.mxu0 0.0
    %604 = vmatpush2.msra.mxu0 0.0
    %605 = vmatprep.subr.mxu0 0.0
    %606 = vmatpush2.msra.mxu0 0.0
    %607 = vmatprep.subr.mxu0 0.0
    %608 = vmatpush2.msra.mxu0 0.0
    %609 = vmatprep.subr.mxu0 0.0
    %610 = vmatpush2.msra.mxu0 0.0
    %611 = vmatprep.subr.mxu0 0.0
    %612 = vmatpush2.msra.mxu0 0.0
    %613 = vmatprep.subr.mxu0 0.0
    %614 = vmatpush2.msra.mxu0 0.0
    %615 = vmatprep.subr.mxu0 0.0
    %616 = vmatpush2.msra.mxu0 0.0
    %617 = vmatprep.mubr.f32.mxu0 0.0
    %618 = vmatmul.mubr.f32.gmra.mxu0 %v548
    %v619 = vpop.f32.mrf.mxu0
    %v620 = vadd.f32 %v540, %v619
    %v621 = vpop.f32.mrf.mxu0
    %622 = vmatprep.mubr.f32.mxu0 0.0
    %623 = vmatmul.mubr.f32.gmra.mxu0 %v551
    %v624 = vpop.f32.mrf.mxu0
    %v625 = vadd.f32 %v545, %v624
    %v626 = vpop.f32.mrf.mxu0
    %627 = vdwg.mxu0
    %v628 = vmax.f32 %v620, 0.0
    %v629 = vmax.f32 %v625, 0.0
    %v630 = vld [vmem:[%s9] sm:$0x1]
    %v631 = vld [vmem:[%s10] sm:$0x1]
    %vm632 = vcmask 130048
    %v634 = vsel %vm632, %v631, 0
    %636 = vmatprep.subr.mxu0 0.0
    %637 = vmatpush1.msra.mxu0 0.0
    %638 = vmatprep.subr.mxu0 0.0
    %639 = vmatpush1.msra.mxu0 0.0
    %640 = vmatprep.subr.mxu0 0.0
    %641 = vmatpush1.msra.mxu0 0.0
    %642 = vmatprep.subr.mxu0 0.0
    %643 = vmatpush1.msra.mxu0 0.0
    %644 = vmatprep.subr.mxu0 0.0
    %645 = vmatpush1.msra.mxu0 0.0
    %646 = vmatprep.subr.mxu0 0.0
    %647 = vmatpush1.msra.mxu0 0.0
    %648 = vmatprep.subr.mxu0 0.0
    %649 = vmatpush1.msra.mxu0 0.0
    %650 = vmatprep.subr.mxu0 0.0
    %651 = vmatpush1.msra.mxu0 0.0
    %652 = vmatprep.subr.mxu0 0.0
    %653 = vmatpush1.msra.mxu0 0.0
    %654 = vmatprep.subr.mxu0 0.0
    %655 = vmatpush1.msra.mxu0 0.0
    %656 = vmatprep.subr.mxu0 0.0
    %657 = vmatpush1.msra.mxu0 0.0
    %658 = vmatprep.subr.mxu0 0.0
    %659 = vmatpush1.msra.mxu0 0.0
    %660 = vmatprep.subr.mxu0 0.0
    %661 = vmatpush1.msra.mxu0 0.0
    %662 = vmatprep.subr.mxu0 0.0
    %663 = vmatpush1.msra.mxu0 0.0
    %664 = vmatprep.subr.mxu0 0.0
    %665 = vmatpush1.msra.mxu0 %v629
    %666 = vmatprep.subr.mxu0 0.0
    %667 = vmatpush1.msra.mxu0 %v628
    %668 = vmatprep.subr.mxu0 0.0
    %669 = vmatpush2.msra.mxu0 0.0
    %670 = vmatprep.subr.mxu0 0.0
    %671 = vmatpush2.msra.mxu0 0.0
    %672 = vmatprep.subr.mxu0 0.0
    %673 = vmatpush2.msra.mxu0 0.0
    %674 = vmatprep.subr.mxu0 0.0
    %675 = vmatpush2.msra.mxu0 0.0
    %676 = vmatprep.subr.mxu0 0.0
    %677 = vmatpush2.msra.mxu0 0.0
    %678 = vmatprep.subr.mxu0 0.0
    %679 = vmatpush2.msra.mxu0 0.0
    %680 = vmatprep.subr.mxu0 0.0
    %681 = vmatpush2.msra.mxu0 0.0
    %682 = vmatprep.subr.mxu0 0.0
    %683 = vmatpush2.msra.mxu0 0.0
    %684 = vmatprep.subr.mxu0 0.0
    %685 = vmatpush2.msra.mxu0 0.0
    %686 = vmatprep.subr.mxu0 0.0
    %687 = vmatpush2.msra.mxu0 0.0
    %688 = vmatprep.subr.mxu0 0.0
    %689 = vmatpush2.msra.mxu0 0.0
    %690 = vmatprep.subr.mxu0 0.0
    %691 = vmatpush2.msra.mxu0 0.0
    %692 = vmatprep.subr.mxu0 0.0
    %693 = vmatpush2.msra.mxu0 0.0
    %694 = vmatprep.subr.mxu0 0.0
    %695 = vmatpush2.msra.mxu0 0.0
    %696 = vmatprep.subr.mxu0 0.0
    %697 = vmatpush2.msra.mxu0 0.0
    %698 = vmatprep.subr.mxu0 0.0
    %699 = vmatpush2.msra.mxu0 0.0
    %700 = vmatprep.mubr.f32.mxu0 0.0
    %701 = vmatmul.mubr.f32.gmra.mxu0 %v634
    %v702 = vpop.f32.mrf.mxu0
    %v703 = vadd.f32 0.0, %v702
    %v704 = vpop.f32.mrf.mxu0
    %705 = vdwg.mxu0
    %v707 = vsel %vm80, %v630, 0
    %709 = vmatprep.subr.mxu0 0.0
    %710 = vmatpush1.msra.mxu0 0.0
    %711 = vmatprep.subr.mxu0 0.0
    %712 = vmatpush1.msra.mxu0 0.0
    %713 = vmatprep.subr.mxu0 0.0
    %714 = vmatpush1.msra.mxu0 0.0
    %715 = vmatprep.subr.mxu0 0.0
    %716 = vmatpush1.msra.mxu0 0.0
    %717 = vmatprep.subr.mxu0 0.0
    %718 = vmatpush1.msra.mxu0 0.0
    %719 = vmatprep.subr.mxu0 0.0
    %720 = vmatpush1.msra.mxu0 0.0
    %721 = vmatprep.subr.mxu0 0.0
    %722 = vmatpush1.msra.mxu0 0.0
    %723 = vmatprep.subr.mxu0 0.0
    %724 = vmatpush1.msra.mxu0 0.0
    %725 = vmatprep.subr.mxu0 0.0
    %726 = vmatpush1.msra.mxu0 0.0
    %727 = vmatprep.subr.mxu0 0.0
    %728 = vmatpush1.msra.mxu0 0.0
    %729 = vmatprep.subr.mxu0 0.0
    %730 = vmatpush1.msra.mxu0 0.0
    %731 = vmatprep.subr.mxu0 0.0
    %732 = vmatpush1.msra.mxu0 0.0
    %733 = vmatprep.subr.mxu0 0.0
    %734 = vmatpush1.msra.mxu0 %v63
    %735 = vmatprep.subr.mxu0 0.0
    %736 = vmatpush1.msra.mxu0 %v62
    %737 = vmatprep.subr.mxu0 0.0
    %738 = vmatpush1.msra.mxu0 %v61
    %739 = vmatprep.subr.mxu0 0.0
    %740 = vmatpush1.msra.mxu0 %v60
    %741 = vmatprep.subr.mxu0 0.0
    %742 = vmatpush2.msra.mxu0 0.0
    %743 = vmatprep.subr.mxu0 0.0
    %744 = vmatpush2.msra.mxu0 0.0
    %745 = vmatprep.subr.mxu0 0.0
    %746 = vmatpush2.msra.mxu0 0.0
    %747 = vmatprep.subr.mxu0 0.0
    %748 = vmatpush2.msra.mxu0 0.0
    %749 = vmatprep.subr.mxu0 0.0
    %750 = vmatpush2.msra.mxu0 0.0
    %751 = vmatprep.subr.mxu0 0.0
    %752 = vmatpush2.msra.mxu0 0.0
    %753 = vmatprep.subr.mxu0 0.0
    %754 = vmatpush2.msra.mxu0 0.0
    %755 = vmatprep.subr.mxu0 0.0
    %756 = vmatpush2.msra.mxu0 0.0
    %757 = vmatprep.subr.mxu0 0.0
    %758 = vmatpush2.msra.mxu0 0.0
    %759 = vmatprep.subr.mxu0 0.0
    %760 = vmatpush2.msra.mxu0 0.0
    %761 = vmatprep.subr.mxu0 0.0
    %762 = vmatpush2.msra.mxu0 0.0
    %763 = vmatprep.subr.mxu0 0.0
    %764 = vmatpush2.msra.mxu0 0.0
    %765 = vmatprep.subr.mxu0 0.0
    %766 = vmatpush2.msra.mxu0 0.0
    %767 = vmatprep.subr.mxu0 0.0
    %768 = vmatpush2.msra.mxu0 0.0
    %769 = vmatprep.subr.mxu0 0.0
    %770 = vmatpush2.msra.mxu0 0.0
    %771 = vmatprep.subr.mxu0 0.0
    %772 = vmatpush2.msra.mxu0 0.0
    %773 = vmatprep.mubr.f32.mxu0 0.0
    %774 = vmatmul.mubr.f32.gmra.mxu0 %v707
    %v775 = vpop.f32.mrf.mxu0
    %v776 = vadd.f32 %v703, %v775
    %v777 = vpop.f32.mrf.mxu0
    %778 = vdwg.mxu0
    %v779 = vld [vmem:[#allocation2] sm:$0x1]
    %781 = vset.pattern.permute.xlu0 0
    %782 = vperm.xlu0 %781, %v779
    %v783 = vpop.permute.xlu0 %782
    %v785 = vlaneseq
    %v786 = vshrl.u32 %v785, 7
    %v787 = vsub.s32 0, %v786
    %v788 = vrot.slane %v783, %v787
    %v789 = vadd.f32 %v776, %v788
    %790 = vst [vmem:[#allocation3] sm:$0x1] %v789
    // Predicated region
    $region50: #{tpu_custom_call.1} parent=1 // pred_check
      _
    $region51: #{tpu_custom_call.1} parent=1 // pred_check_branch
      %792 = sbr.rel (0) target = $region53
    $region52: #{tpu_custom_call.1} parent=1 // pred_region
      %s794 = ssub.s32 16, 16
      %795 = vsyncadd [#allocation4], %s794
      %s797 = sshll.u32 [#allocation3], 4
      %s798 = int_to_ptr.vmem [resolvable:$true] %s797
      %800 = dma.vmem_to_hbm [thread:$0]  %s798, 16, %s12, [#allocation4]
    $region53: #{tpu_custom_call.1} parent=1 // pred_fallthru
      _
    // Predicated region
    $region54: #{tpu_custom_call.1} parent=1 // pred_check
      _
    $region55: #{tpu_custom_call.1} parent=1 // pred_check_branch
      %802 = sbr.rel (0) target = $region57
    $region56: #{tpu_custom_call.1} parent=1 // pred_region
      %803 = dma.done [#allocation4], 16
    $region57: #{tpu_custom_call.1} parent=1 // pred_fallthru
      _
    %804 = vsyncpa [#allocation4], 1

</llo_original>
